<compile_context>
chip_gen: v6e
topology: v6e:2x2x1
jax: 0.10.0
libtpu: 0.0.40
codegen_flags: <defaults>
</compile_context>

<pallas_src>
import jax
import jax.numpy as jnp
from jax.experimental import pallas as pl
from jax.experimental.pallas import tpu as pltpu


def _round_up(v, m):
    return ((v + m - 1) // m) * m


# -----------------------------------------------------------------------------
# Pallas kernel: one stacked, lane-dense matmul + bias per grid step.
#   w_ref : (C_out, KKC)   bf16   weights with all K*K taps stacked on the contraction axis
#   b_ref : (C_out, 1)     f32
#   p_ref : (KKC, T)       bf16   stacked tap patches, one lane tile of the (N*Ho*Wo) axis
#   o_ref : (C_out, T)     f32
# -----------------------------------------------------------------------------
def _stacked_matmul_kernel(w_ref, b_ref, p_ref, o_ref):
    o_ref[...] = (
        jnp.dot(w_ref[...], p_ref[...], preferred_element_type=jnp.float32)
        + b_ref[...]
    ).astype(o_ref.dtype)


# -----------------------------------------------------------------------------
# Plain-JAX layout glue (wrapper-side; keeps the kernel free of relayouts).
# -----------------------------------------------------------------------------
def _reflection_pad(x, pad):
    # PyTorch nn.ReflectionPad2d(pad) on NCHW.
    if pad == 0:
        return x
    return jnp.pad(x, ((0, 0), (0, 0), (pad, pad), (pad, pad)), mode="reflect")


def _stack_taps(x_pad, K, s):
    """Stack the K*K conv taps with the flattened (batch, out-spatial) axis last (lane-dense).

    x_pad: (N, C, Hp, Wp)  ->  P: (C*K*K, N*Ho*Wo) with
        P[c*K*K + kh*K + kw, n*Ho*Wo + i*Wo + j] = x_pad[n, c, s*i + kh, s*j + kw]
    Row ordering matches weight.reshape(C_out, C_in*K*K).
    """
    N, C, Hp, Wp = x_pad.shape
    Ho = (Hp - K) // s + 1
    Wo = (Wp - K) // s + 1
    taps = []
    for kh in range(K):
        for kw in range(K):
            taps.append(
                x_pad[:, :, kh: kh + s * (Ho - 1) + 1: s,
                            kw: kw + s * (Wo - 1) + 1: s]
            )
    p = jnp.stack(taps, axis=2)                       # (N, C, K*K, Ho, Wo)
    p = p.reshape(N, C * K * K, Ho * Wo)              # rows ordered c*K*K + kh*K + kw
    p = p.transpose(1, 0, 2).reshape(C * K * K, N * Ho * Wo)
    return p, Ho, Wo


def reflection_pad_conv(x, weight, bias, *, kernel_size, stride):
    """Forward pass of ReflectionPadConv.

    x      : (N, C_in, H, W)        float32
    weight : (C_out, C_in, K, K)    float32  (PyTorch Conv2d weight layout)
    bias   : (C_out,)               float32
    returns: (N, C_out, Ho, Wo)     float32
    """
    K, s = kernel_size, stride
    pad = K // 2
    N, C_in, _, _ = x.shape
    C_out = weight.shape[0]
    KKC = K * K * C_in

    x_pad = _reflection_pad(x, pad)
    patches, Ho, Wo = _stack_taps(x_pad, K, s)
    patches = patches.astype(jnp.bfloat16)            # bf16 on the memory path
    L = N * Ho * Wo

    # Lane tiling: last axis padded to a multiple of the tile width (>=128 lanes per store).
    LANE = 128
    T = 512 if L >= 512 else _round_up(L, LANE)       # lane tile, multiple of 128
    L_pad = _round_up(L, T)
    if L_pad != L:
        patches = jnp.pad(patches, ((0, 0), (0, L_pad - L)))
    grid = (L_pad // T,)

    w2 = weight.reshape(C_out, KKC).astype(jnp.bfloat16)   # taps stacked on contraction axis
    b_col = bias.reshape(C_out, 1).astype(jnp.float32)

    # VMEM budget from (sublane,128)-tile-padded block sizes (double buffered); cap for v7x.
    w_bytes = _round_up(C_out, 16) * _round_up(KKC, LANE) * 2
    b_bytes = _round_up(C_out, 8) * LANE * 4
    p_bytes = _round_up(KKC, 16) * T * 2
    o_bytes = _round_up(C_out, 8) * T * 4
    need = 2 * (w_bytes + b_bytes + p_bytes + o_bytes) + (1 << 20)
    vmem_limit = int(min(48 * 2**20, max(8 * 2**20, 2 * need)))

    out_flat = pl.pallas_call(
        _stacked_matmul_kernel,
        out_shape=jax.ShapeDtypeStruct((C_out, L_pad), jnp.float32),
        grid_spec=pltpu.PrefetchScalarGridSpec(
            num_scalar_prefetch=0,
            grid=grid,
            in_specs=[
                pl.BlockSpec((C_out, KKC), lambda i: (0, 0)),   # weights (resident)
                pl.BlockSpec((C_out, 1), lambda i: (0, 0)),     # bias
                pl.BlockSpec((KKC, T), lambda i: (0, i)),       # lane tile of stacked taps
            ],
            out_specs=pl.BlockSpec((C_out, T), lambda i: (0, i)),
        ),
        compiler_params=pltpu.CompilerParams(
            dimension_semantics=("parallel",),
            vmem_limit_bytes=vmem_limit,
        ),
    )(w2, b_col, patches)

    out = out_flat[:, :L].reshape(C_out, N, Ho, Wo).transpose(1, 0, 2, 3)
    return out


if __name__ == "__main__":
    # Module config (synthetic, deterministic init)
    in_channels, out_channels = 4, 8
    kernel_size, stride = 3, 2

    key = jax.random.PRNGKey(0)
    kx, k_w, k_b = jax.random.split(key, 3)

    x = jax.random.normal(kx, (2, in_channels, 16, 16), dtype=jnp.float32)

    # Deterministic Conv2d-style init (uniform in +/- 1/sqrt(fan_in))
    fan_in = in_channels * kernel_size * kernel_size
    bound = 1.0 / (fan_in ** 0.5)
    weight = jax.random.uniform(k_w, (out_channels, in_channels, kernel_size, kernel_size),
                                dtype=jnp.float32, minval=-bound, maxval=bound)
    bias = jax.random.uniform(k_b, (out_channels,), dtype=jnp.float32,
                              minval=-bound, maxval=bound)

    out = reflection_pad_conv(x, weight, bias, kernel_size=kernel_size, stride=stride)
    out = jax.block_until_ready(out)

    pad = kernel_size // 2
    x_pad = jnp.pad(x, ((0, 0), (0, 0), (pad, pad), (pad, pad)), mode="reflect")

    # Reference 1 (tight): same bf16-rounded inputs, f32 accumulation via XLA conv.
    x_bf = x_pad.astype(jnp.bfloat16).astype(jnp.float32)
    w_bf = weight.astype(jnp.bfloat16).astype(jnp.float32)
    ref = jax.lax.conv_general_dilated(
        x_bf, w_bf, window_strides=(stride, stride), padding="VALID",
        dimension_numbers=("NCHW", "OIHW", "NCHW"),
        precision=jax.lax.Precision.HIGHEST,
    ) + bias.reshape(1, -1, 1, 1)
    assert out.shape == ref.shape == (2, out_channels, 8, 8), (out.shape, ref.shape)
    assert jnp.allclose(out, ref, rtol=1e-4, atol=1e-4), float(jnp.max(jnp.abs(out - ref)))

    # Reference 2 (loose): pure-f32 reference — bounds the bf16 input-rounding error.
    ref_f32 = jax.lax.conv_general_dilated(
        x_pad, weight, window_strides=(stride, stride), padding="VALID",
        dimension_numbers=("NCHW", "OIHW", "NCHW"),
        precision=jax.lax.Precision.HIGHEST,
    ) + bias.reshape(1, -1, 1, 1)
    assert jnp.allclose(out, ref_f32, rtol=5e-2, atol=5e-2), \
        float(jnp.max(jnp.abs(out - ref_f32)))

    print("KERNEL_OK")
</pallas_src>

<mosaic_0001>
module attributes {stable_mosaic.version = 11 : i64} {
  func.func @_stacked_matmul_kernel(%arg0: i32, %arg1: memref<8x36xbf16, #tpu.memory_space<vmem>>, %arg2: memref<8x1xf32, #tpu.memory_space<vmem>>, %arg3: memref<36x128xbf16, #tpu.memory_space<vmem>>, %arg4: memref<8x128xf32, #tpu.memory_space<vmem>>) attributes {dimension_semantics = [#tpu.dimension_semantics<parallel>], iteration_bounds = array<i64: 1>, scalar_prefetch = 0 : i64, scratch_operands = 0 : i64, tpu.core_type = #tpu.core_type<tc>, window_params = [{pipeline_mode = #tpu.pipeline_mode<synchronous>, transform_indices = @transform_0, window_bounds = array<i64: 8, 36>}, {pipeline_mode = #tpu.pipeline_mode<synchronous>, transform_indices = @transform_1, window_bounds = array<i64: 8, 1>}, {transform_indices = @transform_2, window_bounds = array<i64: 36, 128>}, {transform_indices = @transform_3, window_bounds = array<i64: 8, 128>}]} {
    %c0 = arith.constant 0 : index
    %c0_0 = arith.constant 0 : index
    %0 = vector.load %arg1[%c0, %c0_0] : memref<8x36xbf16, #tpu.memory_space<vmem>>, vector<8x36xbf16>
    %c0_1 = arith.constant 0 : index
    %c0_2 = arith.constant 0 : index
    %1 = vector.load %arg3[%c0_1, %c0_2] : memref<36x128xbf16, #tpu.memory_space<vmem>>, vector<36x128xbf16>
    %cst = arith.constant dense<0.000000e+00> : vector<8x128xf32>
    %2 = tpu.matmul %0, %1, %cst {dimension_numbers = #tpu.dot_dimension_numbers<[1], [0], [0], [1], [0, 0, 1, 1], [], []>} : vector<8x36xbf16>, vector<36x128xbf16>, vector<8x128xf32> -> vector<8x128xf32>
    %c0_3 = arith.constant 0 : index
    %c0_4 = arith.constant 0 : index
    %3 = vector.load %arg2[%c0_3, %c0_4] : memref<8x1xf32, #tpu.memory_space<vmem>>, vector<8x1xf32>
    %4 = vector.broadcast %3 : vector<8x1xf32> to vector<8x128xf32>
    %5 = arith.addf %2, %4 : vector<8x128xf32>
    %c0_5 = arith.constant 0 : index
    %c0_6 = arith.constant 0 : index
    %6 = vector.load %arg4[%c0_5, %c0_6] : memref<8x128xf32, #tpu.memory_space<vmem>>, vector<8x128xf32>
    tpu.vector_store %arg4[%c0_5, %c0_6], %5 {strides = array<i32>} : memref<8x128xf32, #tpu.memory_space<vmem>>, vector<8x128xf32>,
    return
  }
  func.func @transform_0(%arg0: i32) -> (i32, i32) {
    %c0_i32 = arith.constant 0 : i32
    %c0_i32_0 = arith.constant 0 : i32
    %c0_i32_1 = arith.constant 0 : i32
    return %c0_i32, %c0_i32_0 : i32, i32
  }
  func.func @transform_1(%arg0: i32) -> (i32, i32) {
    %c0_i32 = arith.constant 0 : i32
    %c0_i32_0 = arith.constant 0 : i32
    %c0_i32_1 = arith.constant 0 : i32
    return %c0_i32, %c0_i32_0 : i32, i32
  }
  func.func @transform_2(%arg0: i32) -> (i32, i32) {
    %c0_i32 = arith.constant 0 : i32
    %c0_i32_0 = arith.constant 0 : i32
    return %c0_i32, %arg0 : i32, i32
  }
  func.func @transform_3(%arg0: i32) -> (i32, i32) {
    %c0_i32 = arith.constant 0 : i32
    %c0_i32_0 = arith.constant 0 : i32
    return %c0_i32, %arg0 : i32, i32
  }
}

</mosaic_0001>

<llo_original>
// kernel: tpu_custom_call.1
$region0: #{tpu_custom_call.1}
  #allocation0 [shape = 'u32[]', space=smem, size = 0x4, offset = 0x4, fixed_abs, tag = 'smem constant byte address 0x4 - core index']
  #allocation1 [shape = 'u32[144,128]{1,0:T(1,128)}', space=vmem, size = 0x12000, scoped, tag = 'internal scratch']
  %s0 = inlined_call_operand.vmem [shape: bf16[8,36], index: 0, kind: input, shape index: {}]
  %s1 = inlined_call_operand.vmem [shape: f32[8,1], index: 1, kind: input, shape index: {}]
  %s2 = inlined_call_operand.hbm [shape: bf16[36,128], index: 2, kind: input, shape index: {}]
  %s3 = inlined_call_operand.hbm [shape: f32[8,128], index: 3, kind: output, shape index: {}]
  %s4 = sld [smem:[#allocation0]]
  $region26: #{tpu_custom_call.1} parent=0
    _
  %s6 = ssub.s32 1, %s4
  %s7 = scalar_select 0, %s6, %s4
  $region1: #{tpu_custom_call.1} parent=0
    #allocation2 [shape = 'u8[10240]{0}', space=vmem, size = 0x2800, scoped, tag = 'input window, operand 2, single buffered']
    #allocation3 [shape = 's32[1]{0}', space=sflag, size = 0x4, scoped, tag = 'scoped memory for tpu_custom_call.1']
    #allocation4 [shape = 's32[1]{0}', space=sflag, size = 0x4, scoped, tag = 'scoped memory for tpu_custom_call.1']
    #allocation5 [shape = 'u8[4096]{0}', space=vmem, size = 0x1000, scoped, tag = 'output window, operand 0, single buffered']
    %8 = vsyncpa [#allocation3], 0
    %9 = vsyncpa [#allocation4], 0
    // Predicated region
    $region2: #{tpu_custom_call.1} parent=1 // pred_check
      _
    $region3: #{tpu_custom_call.1} parent=1 // pred_check_branch
      %11 = sbr.rel (0) target = $region5
    $region4: #{tpu_custom_call.1} parent=1 // pred_region
      _
    $region5: #{tpu_custom_call.1} parent=1 // pred_fallthru
      _
    // Predicated region
    $region6: #{tpu_custom_call.1} parent=1 // pred_check
      _
    $region7: #{tpu_custom_call.1} parent=1 // pred_check_branch
      %13 = sbr.rel (0) target = $region9
    $region8: #{tpu_custom_call.1} parent=1 // pred_region
      _
    $region9: #{tpu_custom_call.1} parent=1 // pred_fallthru
      _
    // Predicated region
    $region10: #{tpu_custom_call.1} parent=1 // pred_check
      _
    $region11: #{tpu_custom_call.1} parent=1 // pred_check_branch
      %15 = sbr.rel (0) target = $region13
    $region12: #{tpu_custom_call.1} parent=1 // pred_region
      %s17 = ssub.s32 320, 320
      %18 = vsyncadd [#allocation3], %s17
      %s19 = sshll.u32 [#allocation2], 4
      %s20 = int_to_ptr.vmem [resolvable:$true] %s19
      %25 = dma.hbm_to_vmem [thread:$0]  %s2, 320, %s20, [#allocation3], 64, 64, 4
    $region13: #{tpu_custom_call.1} parent=1 // pred_fallthru
      _
    // Predicated region
    $region14: #{tpu_custom_call.1} parent=1 // pred_check
      _
    $region15: #{tpu_custom_call.1} parent=1 // pred_check_branch
      %27 = sbr.rel (0) target = $region17
    $region16: #{tpu_custom_call.1} parent=1 // pred_region
      %28 = dma.done [#allocation3], 320
    $region17: #{tpu_custom_call.1} parent=1 // pred_fallthru
      _
    %v30 = vld [vmem:[%s0] sm:$0xf]
    %v31 = vld [vmem:[#allocation2] sm:$0xf]
    %v32 = vld [vmem:[#allocation2 + $0x4] sm:$0xf]
    %v33 = vld [vmem:[#allocation2 + $0x8] sm:$0xf]
    %v34 = vld [vmem:[#allocation2 + $0xc] sm:$0xf]
    %v35 = vld [vmem:[#allocation2 + $0x10] sm:$0x3]
    %v36 = vld [vmem:[%s1] sm:$0xff]
    %38 = vset.pattern.permute.xlu0 0
    %39 = vperm.xlu0 %38, %v36
    %v40 = vpop.permute.xlu0 %39
    %v47 = vunpack.c.l.b16 %v31
    %v48 = vunpack.c.l.b16 %v32
    %v49 = vunpack.c.l.b16 %v33
    %v50 = vunpack.c.l.b16 %v34
    %v51 = vunpack.c.l.b16 %v35
    %v52 = vpack.c.b16 %v48, %v47
    %v53 = vpack.c.b16 %v50, %v49
    %v54 = vpack.c.b16 %v51, %v51
    %vm57 = vcmask 293888
    %v59 = vsel %vm57, %v30, 0
    %vm61 = vcmask 1041408
    %v63 = vsel %vm61, %v54, 0
    %65 = vmatprep.subr.bf16.mxu0 0
    %66 = vmatpush1.bf16.msra.mxu0 0
    %67 = vmatprep.subr.bf16.mxu0 0
    %68 = vmatpush1.bf16.msra.mxu0 0
    %69 = vmatprep.subr.bf16.mxu0 0
    %70 = vmatpush1.bf16.msra.mxu0 0
    %71 = vmatprep.subr.bf16.mxu0 0
    %72 = vmatpush1.bf16.msra.mxu0 0
    %73 = vmatprep.subr.bf16.mxu0 0
    %74 = vmatpush1.bf16.msra.mxu0 0
    %75 = vmatprep.subr.bf16.mxu0 0
    %76 = vmatpush1.bf16.msra.mxu0 %v63
    %77 = vmatprep.subr.bf16.mxu0 0
    %78 = vmatpush1.bf16.msra.mxu0 %v53
    %79 = vmatprep.subr.bf16.mxu0 0
    %80 = vmatpush1.bf16.msra.mxu0 %v52
    %81 = vmatprep.subr.bf16.mxu0 0
    %82 = vmatpush2.bf16.msra.mxu0 0
    %83 = vmatprep.subr.bf16.mxu0 0
    %84 = vmatpush2.bf16.msra.mxu0 0
    %85 = vmatprep.subr.bf16.mxu0 0
    %86 = vmatpush2.bf16.msra.mxu0 0
    %87 = vmatprep.subr.bf16.mxu0 0
    %88 = vmatpush2.bf16.msra.mxu0 0
    %89 = vmatprep.subr.bf16.mxu0 0
    %90 = vmatpush2.bf16.msra.mxu0 0
    %91 = vmatprep.subr.bf16.mxu0 0
    %92 = vmatpush2.bf16.msra.mxu0 0
    %93 = vmatprep.subr.bf16.mxu0 0
    %94 = vmatpush2.bf16.msra.mxu0 0
    %95 = vmatprep.subr.bf16.mxu0 0
    %96 = vmatpush2.bf16.msra.mxu0 0
    %97 = vmatprep.mubr.bf16.mxu0 0
    %98 = vmatmul.mubr.bf16.gmra.mxu0 %v59
    %v99 = vpop.f32.mrf.mxu0
    %v100 = vadd.f32 %v40, %v99
    %v101 = vpop.f32.mrf.mxu0
    %v102 = vpop.f32.mrf.mxu0
    %v103 = vpop.f32.mrf.mxu0
    %104 = vdwg.mxu0
    %105 = vst [vmem:[#allocation5] sm:$0xff] %v100
    // Predicated region
    $region18: #{tpu_custom_call.1} parent=1 // pred_check
      _
    $region19: #{tpu_custom_call.1} parent=1 // pred_check_branch
      %107 = sbr.rel (0) target = $region21
    $region20: #{tpu_custom_call.1} parent=1 // pred_region
      %s109 = ssub.s32 128, 128
      %110 = vsyncadd [#allocation4], %s109
      %s112 = sshll.u32 [#allocation5], 4
      %s113 = int_to_ptr.vmem [resolvable:$true] %s112
      %115 = dma.vmem_to_hbm [thread:$0]  %s113, 128, %s3, [#allocation4]
    $region21: #{tpu_custom_call.1} parent=1 // pred_fallthru
      _
    // Predicated region
    $region22: #{tpu_custom_call.1} parent=1 // pred_check
      _
    $region23: #{tpu_custom_call.1} parent=1 // pred_check_branch
      %117 = sbr.rel (0) target = $region25
    $region24: #{tpu_custom_call.1} parent=1 // pred_region
      %118 = dma.done [#allocation4], 128
    $region25: #{tpu_custom_call.1} parent=1 // pred_fallthru
      _
    %119 = vsyncpa [#allocation3], 1
    %120 = vsyncpa [#allocation4], 1

</llo_original>
